<compile_context>
chip_gen: v7x
topology: tpu7x:2x2x1
jax: 0.10.0
libtpu: 0.0.40
codegen_flags: <defaults>
</compile_context>

<pallas_src>
import functools

import jax
import jax.numpy as jnp
from jax.experimental import pallas as pl
from jax.experimental.pallas import tpu as pltpu


# --------------------------------------------------------------------------- #
# Helpers
# --------------------------------------------------------------------------- #
def _round_up(x: int, m: int) -> int:
    return (x + m - 1) // m * m


def _cdiv(a: int, b: int) -> int:
    return (a + b - 1) // b


def _vmem_budget_bytes() -> int:
    """Generation-aware usable VMEM budget (85% of physical, capped)."""
    cap = 64 << 20  # conservative default (v7x per-TC)
    try:
        info = pltpu.get_tpu_info()
        cap = int(getattr(info, "vmem_capacity_bytes", cap))
    except Exception:
        pass
    return min(int(cap * 0.85), 112 << 20)


def _vmem_bytes(tm, th, in_p, nc_p, n_h, w_itemsize, out_itemsize):
    """Per-step VMEM requirement (double-buffered tiles + live temporaries)."""
    return (
        2 * tm * in_p * w_itemsize          # x tile (compute dtype)
        + 2 * in_p * th * w_itemsize        # W1^T tile
        + 2 * 8 * th * 4                    # b1 tile (f32, sublane-padded)
        + 2 * th * nc_p * w_itemsize        # W2^T tile
        + 2 * 8 * nc_p * 4                  # b2 tile (f32)
        + 2 * tm * nc_p * out_itemsize      # output tile
        + (tm * nc_p * 4 if n_h > 1 else 0)  # f32 accumulator scratch
        + 2 * tm * th * 4                   # first-matmul result + ReLU copy (f32)
    )


def _choose_th(hidden, in_p, nc_p, w_itemsize, th_max, budget):
    """Prefer a single hidden tile (weights VMEM-resident, fetched once)."""
    h_full = _round_up(hidden, 128)

    def w_bytes(t):
        return 2 * (in_p * t + t * nc_p) * w_itemsize + 2 * 8 * t * 4

    if h_full <= th_max and w_bytes(h_full) <= budget // 2:
        return h_full, h_full  # single hidden tile
    # fall back: largest lane-aligned tile whose weight slabs fit comfortably
    cap = _round_up(min(th_max, h_full), 128)
    while cap > 128 and w_bytes(cap) > budget // 3:
        cap -= 128
    cap = max(cap, 128)
    n_h = _cdiv(hidden, cap)
    th = _round_up(_cdiv(hidden, n_h), 128)
    return th, n_h * th


def _choose_tm(B, tm_max, sub, bytes_fn, budget):
    """Balanced batch tile; split >=2 ways for large B (v7x 2-TC megacore)."""
    n_b = max(1, _cdiv(B, tm_max))
    if n_b == 1 and B >= 64:
        n_b = 2
    while True:
        tm = _round_up(_cdiv(B, n_b), sub)
        if bytes_fn(tm) <= budget or tm <= sub:
            return tm, n_b
        n_b += 1


# --------------------------------------------------------------------------- #
# Kernels
# --------------------------------------------------------------------------- #
def _ffn_kernel_single(x_ref, w1t_ref, b1_ref, w2t_ref, b2_ref, o_ref):
    """Single hidden tile: no accumulator scratch, no init/finalize phases."""
    h = jnp.dot(x_ref[...], w1t_ref[...], preferred_element_type=jnp.float32)
    h = jnp.maximum(h + b1_ref[...], 0.0)                    # f32 bias + ReLU
    out = jnp.dot(h.astype(w2t_ref.dtype), w2t_ref[...],
                  preferred_element_type=jnp.float32)
    o_ref[...] = (out + b2_ref[...]).astype(o_ref.dtype)


def _ffn_kernel_tiled(x_ref, w1t_ref, b1_ref, w2t_ref, b2_ref, o_ref, acc_ref):
    """Hidden-tiled reduction with an f32 VMEM accumulator."""
    h_idx = pl.program_id(1)

    @pl.when(h_idx == 0)
    def _init():
        acc_ref[...] = jnp.zeros_like(acc_ref)

    h = jnp.dot(x_ref[...], w1t_ref[...], preferred_element_type=jnp.float32)
    h = jnp.maximum(h + b1_ref[...], 0.0)                    # exact per-chunk ReLU
    acc_ref[...] += jnp.dot(h.astype(w2t_ref.dtype), w2t_ref[...],
                            preferred_element_type=jnp.float32)

    @pl.when(h_idx == pl.num_programs(1) - 1)
    def _finalize():
        o_ref[...] = (acc_ref[...] + b2_ref[...]).astype(o_ref.dtype)


# --------------------------------------------------------------------------- #
# Wrappers
# --------------------------------------------------------------------------- #
def pack_ffn_params(w1, b1, w2, b2, *, compute_dtype=jnp.bfloat16, th_max=2048):
    """Pre-pack weights ONCE (transpose + lane-pad + cast).

    w1: [hidden, input_size]   b1: [hidden]
    w2: [num_classes, hidden]  b2: [num_classes]
    Returns ((w1t, b1, w2t, b2), meta) to feed feedforward_packed.
    """
    hidden, input_size = w1.shape
    num_classes = w2.shape[0]
    in_p = _round_up(input_size, 128)
    nc_p = _round_up(num_classes, 128)
    w_itemsize = jnp.dtype(compute_dtype).itemsize

    th, h_p = _choose_th(hidden, in_p, nc_p, w_itemsize, th_max,
                         _vmem_budget_bytes())

    # Zero padding is exact: padded input cols hit zero W1^T rows, padded
    # hidden units have zero weight+bias (relu(0)=0 times zero W2^T rows),
    # padded output cols are sliced off in the forward.
    w1t = jnp.pad(w1.T, ((0, in_p - input_size), (0, h_p - hidden))).astype(compute_dtype)
    b1p = jnp.pad(b1, (0, h_p - hidden)).astype(jnp.float32).reshape(1, h_p)
    w2t = jnp.pad(w2.T, ((0, h_p - hidden), (0, nc_p - num_classes))).astype(compute_dtype)
    b2p = jnp.pad(b2, (0, nc_p - num_classes)).astype(jnp.float32).reshape(1, nc_p)

    return (w1t, b1p, w2t, b2p), dict(num_classes=num_classes, th=th)


@functools.partial(jax.jit, static_argnames=("num_classes", "th", "tm_max"))
def feedforward_packed(x, w1t, b1p, w2t, b2p, *, num_classes, th, tm_max=512):
    """Fused FFN forward on pre-packed params.  x: [B, input_size]."""
    B, input_size = x.shape
    in_p, h_p = w1t.shape
    nc_p = w2t.shape[1]
    n_h = h_p // th

    compute_dtype = w1t.dtype
    w_itemsize = jnp.dtype(compute_dtype).itemsize
    out_dtype = x.dtype
    out_itemsize = jnp.dtype(out_dtype).itemsize
    sub = max(8, 32 // w_itemsize)           # sublane alignment for the batch tile

    budget = _vmem_budget_bytes()
    bytes_fn = lambda t: _vmem_bytes(t, th, in_p, nc_p, n_h, w_itemsize, out_itemsize)
    tm, n_b = _choose_tm(B, tm_max, sub, bytes_fn, budget)
    b_p = n_b * tm

    xp = jnp.pad(x, ((0, b_p - B), (0, in_p - input_size))).astype(compute_dtype)

    needed = bytes_fn(tm)
    vmem_limit = max(16 << 20, needed + (4 << 20))   # never below requirement

    cost = pl.CostEstimate(
        flops=2 * b_p * h_p * (in_p + nc_p),
        transcendentals=0,
        bytes_accessed=(xp.size * w_itemsize + w1t.size * w_itemsize
                        + w2t.size * w_itemsize + b1p.size * 4 + b2p.size * 4
                        + b_p * nc_p * out_itemsize),
    )

    if n_h == 1:
        # Weights resident in VMEM; streamed from HBM exactly once per call.
        grid = (n_b,)
        in_specs = [
            pl.BlockSpec((tm, in_p), lambda i: (i, 0)),   # x
            pl.BlockSpec((in_p, h_p), lambda i: (0, 0)),  # W1^T
            pl.BlockSpec((1, h_p), lambda i: (0, 0)),     # b1
            pl.BlockSpec((h_p, nc_p), lambda i: (0, 0)),  # W2^T
            pl.BlockSpec((1, nc_p), lambda i: (0, 0)),    # b2
        ]
        out_specs = pl.BlockSpec((tm, nc_p), lambda i: (i, 0))
        scratch = []
        kernel = _ffn_kernel_single
        dims = ("parallel",)
    else:
        grid = (n_b, n_h)
        in_specs = [
            pl.BlockSpec((tm, in_p), lambda i, h: (i, 0)),   # x (resident over h)
            pl.BlockSpec((in_p, th), lambda i, h: (0, h)),   # W1^T chunk
            pl.BlockSpec((1, th), lambda i, h: (0, h)),      # b1 chunk
            pl.BlockSpec((th, nc_p), lambda i, h: (h, 0)),   # W2^T chunk
            pl.BlockSpec((1, nc_p), lambda i, h: (0, 0)),    # b2
        ]
        out_specs = pl.BlockSpec((tm, nc_p), lambda i, h: (i, 0))
        scratch = [pltpu.VMEM((tm, nc_p), jnp.float32)]
        kernel = _ffn_kernel_tiled
        dims = ("parallel", "arbitrary")

    out_p = pl.pallas_call(
        kernel,
        out_shape=jax.ShapeDtypeStruct((b_p, nc_p), out_dtype),
        grid_spec=pltpu.PrefetchScalarGridSpec(
            num_scalar_prefetch=0,
            grid=grid,
            in_specs=in_specs,
            out_specs=out_specs,
            scratch_shapes=scratch,
        ),
        compiler_params=pltpu.CompilerParams(
            dimension_semantics=dims,
            vmem_limit_bytes=int(vmem_limit),
        ),
        cost_estimate=cost,
    )(xp, w1t, b1p, w2t, b2p)

    return out_p[:B, :num_classes]


def feedforward(x, w1, b1, w2, b2, *, compute_dtype=jnp.bfloat16,
                th_max=2048, tm_max=512):
    """Convenience wrapper (packs every call; use pack_ffn_params in prod)."""
    packed, meta = pack_ffn_params(w1, b1, w2, b2,
                                   compute_dtype=compute_dtype, th_max=th_max)
    return feedforward_packed(x, *packed, tm_max=tm_max, **meta)


# --------------------------------------------------------------------------- #
# References + tests
# --------------------------------------------------------------------------- #
def _reference(x, w1, b1, w2, b2):
    h = jnp.maximum(x @ w1.T + b1, 0.0)
    return h @ w2.T + b2


def _reference_q(x, w1, b1, w2, b2, dt):
    """Reference with the same operand quantization as the kernel (f32 acc)."""
    h = jnp.dot(x.astype(dt), w1.T.astype(dt),
                preferred_element_type=jnp.float32) + b1
    h = jnp.maximum(h, 0.0)
    return jnp.dot(h.astype(dt), w2.T.astype(dt),
                   preferred_element_type=jnp.float32) + b2


if __name__ == "__main__":
    key = jax.random.PRNGKey(0)

    # ---- test 1: small shapes, f32 compute -> exact vs PyTorch-style f32 ---
    batch, input_size, hidden_size, num_classes = 8, 64, 32, 10
    kx, kw1, kb1, kw2, kb2 = jax.random.split(key, 5)
    x = jax.random.normal(kx, (batch, input_size), dtype=jnp.float32)
    w1 = jax.random.normal(kw1, (hidden_size, input_size), dtype=jnp.float32) * 0.1
    b1 = jax.random.normal(kb1, (hidden_size,), dtype=jnp.float32) * 0.1
    w2 = jax.random.normal(kw2, (num_classes, hidden_size), dtype=jnp.float32) * 0.1
    b2 = jax.random.normal(kb2, (num_classes,), dtype=jnp.float32) * 0.1

    out = jax.block_until_ready(
        feedforward(x, w1, b1, w2, b2, compute_dtype=jnp.float32))
    ref = _reference(x, w1, b1, w2, b2)
    assert out.shape == (batch, num_classes)
    assert jnp.allclose(out, ref, atol=1e-5, rtol=1e-5)

    # ---- test 2: bf16 operands, balanced batch tiles, single hidden tile ----
    B2, IN2, HID2, NC2 = 300, 96, 600, 10
    kx, kw1, kb1, kw2, kb2 = jax.random.split(jax.random.PRNGKey(1), 5)
    x2 = jax.random.normal(kx, (B2, IN2), dtype=jnp.float32)
    w1_2 = jax.random.normal(kw1, (HID2, IN2), dtype=jnp.float32) * 0.05
    b1_2 = jax.random.normal(kb1, (HID2,), dtype=jnp.float32) * 0.05
    w2_2 = jax.random.normal(kw2, (NC2, HID2), dtype=jnp.float32) * 0.05
    b2_2 = jax.random.normal(kb2, (NC2,), dtype=jnp.float32) * 0.05

    out2 = jax.block_until_ready(feedforward(x2, w1_2, b1_2, w2_2, b2_2))
    ref2_q = _reference_q(x2, w1_2, b1_2, w2_2, b2_2, jnp.bfloat16)
    ref2_f = _reference(x2, w1_2, b1_2, w2_2, b2_2)
    assert out2.shape == (B2, NC2)
    assert jnp.allclose(out2, ref2_q, atol=2e-3, rtol=2e-3)   # same quantization
    assert jnp.allclose(out2, ref2_f, atol=1e-1, rtol=1e-1)   # sanity vs f32

    # ---- test 3: force hidden tiling (accumulator / pl.when path), bf16 -----
    B3, IN3, HID3, NC3 = 96, 200, 512, 10
    kx, kw1, kb1, kw2, kb2 = jax.random.split(jax.random.PRNGKey(2), 5)
    x3 = jax.random.normal(kx, (B3, IN3), dtype=jnp.float32)
    w1_3 = jax.random.normal(kw1, (HID3, IN3), dtype=jnp.float32) * 0.05
    b1_3 = jax.random.normal(kb1, (HID3,), dtype=jnp.float32) * 0.05
    w2_3 = jax.random.normal(kw2, (NC3, HID3), dtype=jnp.float32) * 0.05
    b2_3 = jax.random.normal(kb2, (NC3,), dtype=jnp.float32) * 0.05

    out3 = jax.block_until_ready(
        feedforward(x3, w1_3, b1_3, w2_3, b2_3, th_max=128))
    ref3_q = _reference_q(x3, w1_3, b1_3, w2_3, b2_3, jnp.bfloat16)
    assert out3.shape == (B3, NC3)
    assert jnp.allclose(out3, ref3_q, atol=2e-3, rtol=2e-3)

    print("KERNEL_OK")
</pallas_src>

<mosaic_0001>
module attributes {stable_mosaic.version = 11 : i64} {
  func.func @_ffn_kernel_single(%arg0: i32, %arg1: memref<8x128xf32, #tpu.memory_space<vmem>>, %arg2: memref<128x128xf32, #tpu.memory_space<vmem>>, %arg3: memref<1x128xf32, #tpu.memory_space<vmem>>, %arg4: memref<128x128xf32, #tpu.memory_space<vmem>>, %arg5: memref<1x128xf32, #tpu.memory_space<vmem>>, %arg6: memref<8x128xf32, #tpu.memory_space<vmem>>) attributes {dimension_semantics = [#tpu.dimension_semantics<parallel>], iteration_bounds = array<i64: 1>, scalar_prefetch = 0 : i64, scratch_operands = 0 : i64, tpu.core_type = #tpu.core_type<tc>, window_params = [{transform_indices = @transform_0, window_bounds = array<i64: 8, 128>}, {pipeline_mode = #tpu.pipeline_mode<synchronous>, transform_indices = @transform_1, window_bounds = array<i64: 128, 128>}, {pipeline_mode = #tpu.pipeline_mode<synchronous>, transform_indices = @transform_2, window_bounds = array<i64: 1, 128>}, {pipeline_mode = #tpu.pipeline_mode<synchronous>, transform_indices = @transform_3, window_bounds = array<i64: 128, 128>}, {pipeline_mode = #tpu.pipeline_mode<synchronous>, transform_indices = @transform_4, window_bounds = array<i64: 1, 128>}, {transform_indices = @transform_5, window_bounds = array<i64: 8, 128>}]} {
    %c0 = arith.constant 0 : index
    %c0_0 = arith.constant 0 : index
    %0 = vector.load %arg1[%c0, %c0_0] : memref<8x128xf32, #tpu.memory_space<vmem>>, vector<8x128xf32>
    %c0_1 = arith.constant 0 : index
    %c0_2 = arith.constant 0 : index
    %1 = vector.load %arg2[%c0_1, %c0_2] : memref<128x128xf32, #tpu.memory_space<vmem>>, vector<128x128xf32>
    %cst = arith.constant dense<0.000000e+00> : vector<8x128xf32>
    %2 = tpu.matmul %0, %1, %cst {dimension_numbers = #tpu.dot_dimension_numbers<[1], [0], [0], [1], [0, 0, 1, 1], [], []>} : vector<8x128xf32>, vector<128x128xf32>, vector<8x128xf32> -> vector<8x128xf32>
    %c0_3 = arith.constant 0 : index
    %c0_4 = arith.constant 0 : index
    %3 = vector.load %arg3[%c0_3, %c0_4] : memref<1x128xf32, #tpu.memory_space<vmem>>, vector<1x128xf32>
    %4 = vector.broadcast %3 : vector<1x128xf32> to vector<8x128xf32>
    %5 = arith.addf %2, %4 : vector<8x128xf32>
    %cst_5 = arith.constant 0.000000e+00 : f32
    %6 = vector.broadcast %cst_5 : f32 to vector<8x128xf32>
    %7 = arith.maximumf %5, %6 : vector<8x128xf32>
    %c0_6 = arith.constant 0 : index
    %c0_7 = arith.constant 0 : index
    %8 = vector.load %arg4[%c0_6, %c0_7] : memref<128x128xf32, #tpu.memory_space<vmem>>, vector<128x128xf32>
    %cst_8 = arith.constant dense<0.000000e+00> : vector<8x128xf32>
    %9 = tpu.matmul %7, %8, %cst_8 {dimension_numbers = #tpu.dot_dimension_numbers<[1], [0], [0], [1], [0, 0, 1, 1], [], []>} : vector<8x128xf32>, vector<128x128xf32>, vector<8x128xf32> -> vector<8x128xf32>
    %c0_9 = arith.constant 0 : index
    %c0_10 = arith.constant 0 : index
    %10 = vector.load %arg5[%c0_9, %c0_10] : memref<1x128xf32, #tpu.memory_space<vmem>>, vector<1x128xf32>
    %11 = vector.broadcast %10 : vector<1x128xf32> to vector<8x128xf32>
    %12 = arith.addf %9, %11 : vector<8x128xf32>
    %c0_11 = arith.constant 0 : index
    %c0_12 = arith.constant 0 : index
    %13 = vector.load %arg6[%c0_11, %c0_12] : memref<8x128xf32, #tpu.memory_space<vmem>>, vector<8x128xf32>
    tpu.vector_store %arg6[%c0_11, %c0_12], %12 {strides = array<i32>} : memref<8x128xf32, #tpu.memory_space<vmem>>, vector<8x128xf32>,
    return
  }
  func.func @transform_0(%arg0: i32) -> (i32, i32) {
    %c0_i32 = arith.constant 0 : i32
    %c0_i32_0 = arith.constant 0 : i32
    return %arg0, %c0_i32 : i32, i32
  }
  func.func @transform_1(%arg0: i32) -> (i32, i32) {
    %c0_i32 = arith.constant 0 : i32
    %c0_i32_0 = arith.constant 0 : i32
    %c0_i32_1 = arith.constant 0 : i32
    return %c0_i32, %c0_i32_0 : i32, i32
  }
  func.func @transform_2(%arg0: i32) -> (i32, i32) {
    %c0_i32 = arith.constant 0 : i32
    %c0_i32_0 = arith.constant 0 : i32
    %c0_i32_1 = arith.constant 0 : i32
    return %c0_i32, %c0_i32_0 : i32, i32
  }
  func.func @transform_3(%arg0: i32) -> (i32, i32) {
    %c0_i32 = arith.constant 0 : i32
    %c0_i32_0 = arith.constant 0 : i32
    %c0_i32_1 = arith.constant 0 : i32
    return %c0_i32, %c0_i32_0 : i32, i32
  }
  func.func @transform_4(%arg0: i32) -> (i32, i32) {
    %c0_i32 = arith.constant 0 : i32
    %c0_i32_0 = arith.constant 0 : i32
    %c0_i32_1 = arith.constant 0 : i32
    return %c0_i32, %c0_i32_0 : i32, i32
  }
  func.func @transform_5(%arg0: i32) -> (i32, i32) {
    %c0_i32 = arith.constant 0 : i32
    %c0_i32_0 = arith.constant 0 : i32
    return %arg0, %c0_i32 : i32, i32
  }
}

</mosaic_0001>

<llo_original>
// kernel: feedforward_packed.1
$region0: #{feedforward_packed.1}
  #allocation0 [shape = 'u32[]', space=smem, size = 0x4, offset = 0x4, fixed_abs, tag = 'smem constant byte address 0x4 - core index']
  #allocation1 [shape = 'u32[144,128]{1,0:T(1,128)}', space=vmem, size = 0x12000, scoped, tag = 'internal scratch']
  %s0 = inlined_call_operand.vmem [shape: f32[8,128], index: 0, kind: input, shape index: {}]
  %s1 = inlined_call_operand.hbm [shape: f32[128,128], index: 1, kind: input, shape index: {}]
  %s2 = inlined_call_operand.vmem [shape: f32[1,128], index: 2, kind: input, shape index: {}]
  %s3 = inlined_call_operand.hbm [shape: f32[128,128], index: 3, kind: input, shape index: {}]
  %s4 = inlined_call_operand.vmem [shape: f32[1,128], index: 4, kind: input, shape index: {}]
  %s5 = inlined_call_operand.hbm [shape: f32[8,128], index: 5, kind: output, shape index: {}]
  %s6 = sld [smem:[#allocation0]]
  $region38: #{feedforward_packed.1} parent=0
    _
  %s8 = ssub.s32 1, %s6
  %s9 = scalar_select 0, %s8, %s6
  $region1: #{feedforward_packed.1} parent=0
    #allocation2 [shape = 'u8[65536]{0}', space=vmem, size = 0x10000, scoped, tag = 'input window, operand 1, single buffered']
    #allocation3 [shape = 's32[1]{0}', space=sflag, size = 0x4, scoped, tag = 'scoped memory for feedforward_packed.1']
    #allocation4 [shape = 's32[1]{0}', space=sflag, size = 0x4, scoped, tag = 'scoped memory for feedforward_packed.1']
    #allocation5 [shape = 'u8[65536]{0}', space=vmem, size = 0x10000, scoped, tag = 'input window, operand 3, single buffered']
    #allocation6 [shape = 's32[1]{0}', space=sflag, size = 0x4, scoped, tag = 'scoped memory for feedforward_packed.1']
    #allocation7 [shape = 'u8[4096]{0}', space=vmem, size = 0x1000, scoped, tag = 'output window, operand 0, single buffered']
    %10 = vsyncpa [#allocation3], 0
    %11 = vsyncpa [#allocation6], 0
    %12 = vsyncpa [#allocation4], 0
    // Predicated region
    $region2: #{feedforward_packed.1} parent=1 // pred_check
      _
    $region3: #{feedforward_packed.1} parent=1 // pred_check_branch
      %14 = sbr.rel (0) target = $region5
    $region4: #{feedforward_packed.1} parent=1 // pred_region
      _
    $region5: #{feedforward_packed.1} parent=1 // pred_fallthru
      _
    // Predicated region
    $region6: #{feedforward_packed.1} parent=1 // pred_check
      _
    $region7: #{feedforward_packed.1} parent=1 // pred_check_branch
      %16 = sbr.rel (0) target = $region9
    $region8: #{feedforward_packed.1} parent=1 // pred_region
      %s18 = ssub.s32 2048, 2048
      %19 = vsyncadd [#allocation3], %s18
      %s20 = sshll.u32 [#allocation2], 4
      %s21 = int_to_ptr.vmem [resolvable:$true] %s20
      %26 = dma.hbm_to_vmem [thread:$0]  %s1, 2048, %s21, [#allocation3], 128, 128, 8
    $region9: #{feedforward_packed.1} parent=1 // pred_fallthru
      _
    // Predicated region
    $region10: #{feedforward_packed.1} parent=1 // pred_check
      _
    $region11: #{feedforward_packed.1} parent=1 // pred_check_branch
      %28 = sbr.rel (0) target = $region13
    $region12: #{feedforward_packed.1} parent=1 // pred_region
      _
    $region13: #{feedforward_packed.1} parent=1 // pred_fallthru
      _
    // Predicated region
    $region14: #{feedforward_packed.1} parent=1 // pred_check
      _
    $region15: #{feedforward_packed.1} parent=1 // pred_check_branch
      %30 = sbr.rel (0) target = $region17
    $region16: #{feedforward_packed.1} parent=1 // pred_region
      %s32 = ssub.s32 2048, 2048
      %33 = vsyncadd [#allocation6], %s32
      %s34 = sshll.u32 [#allocation5], 4
      %s35 = int_to_ptr.vmem [resolvable:$true] %s34
      %40 = dma.hbm_to_vmem [thread:$0]  %s3, 2048, %s35, [#allocation6], 128, 128, 8
    $region17: #{feedforward_packed.1} parent=1 // pred_fallthru
      _
    // Predicated region
    $region18: #{feedforward_packed.1} parent=1 // pred_check
      _
    $region19: #{feedforward_packed.1} parent=1 // pred_check_branch
      %42 = sbr.rel (0) target = $region21
    $region20: #{feedforward_packed.1} parent=1 // pred_region
      _
    $region21: #{feedforward_packed.1} parent=1 // pred_fallthru
      _
    // Predicated region
    $region22: #{feedforward_packed.1} parent=1 // pred_check
      _
    $region23: #{feedforward_packed.1} parent=1 // pred_check_branch
      %44 = sbr.rel (0) target = $region25
    $region24: #{feedforward_packed.1} parent=1 // pred_region
      %45 = dma.done [#allocation3], 2048
    $region25: #{feedforward_packed.1} parent=1 // pred_fallthru
      _
    // Predicated region
    $region26: #{feedforward_packed.1} parent=1 // pred_check
      _
    $region27: #{feedforward_packed.1} parent=1 // pred_check_branch
      %47 = sbr.rel (0) target = $region29
    $region28: #{feedforward_packed.1} parent=1 // pred_region
      %48 = dma.done [#allocation6], 2048
    $region29: #{feedforward_packed.1} parent=1 // pred_fallthru
      _
    %v49 = vld [vmem:[%s0] sm:$0xff]
    %v50 = vld [vmem:[#allocation2] sm:$0xff]
    %v51 = vld [vmem:[#allocation2 + $0x8] sm:$0xff]
    %v52 = vld [vmem:[#allocation2 + $0x10] sm:$0xff]
    %v53 = vld [vmem:[#allocation2 + $0x18] sm:$0xff]
    %v54 = vld [vmem:[#allocation2 + $0x20] sm:$0xff]
    %v55 = vld [vmem:[#allocation2 + $0x28] sm:$0xff]
    %v56 = vld [vmem:[#allocation2 + $0x30] sm:$0xff]
    %v57 = vld [vmem:[#allocation2 + $0x38] sm:$0xff]
    %v58 = vld [vmem:[#allocation2 + $0x40] sm:$0xff]
    %v59 = vld [vmem:[#allocation2 + $0x48] sm:$0xff]
    %v60 = vld [vmem:[#allocation2 + $0x50] sm:$0xff]
    %v61 = vld [vmem:[#allocation2 + $0x58] sm:$0xff]
    %v62 = vld [vmem:[#allocation2 + $0x60] sm:$0xff]
    %v63 = vld [vmem:[#allocation2 + $0x68] sm:$0xff]
    %v64 = vld [vmem:[#allocation2 + $0x70] sm:$0xff]
    %v65 = vld [vmem:[#allocation2 + $0x78] sm:$0xff]
    %v66 = vld [vmem:[%s2] sm:$0x1]
    %v68 = vlaneseq
    %v69 = vshrl.u32 %v68, 7
    %v70 = vsub.s32 0, %v69
    %v71 = vrot.slane %v66, %v70
    %73 = vmatprep.subr.mxu0 0.0
    %74 = vmatpush1.msra.mxu0 %v50
    %75 = vmatprep.subr.mxu0 0.0
    %76 = vmatpush1.msra.mxu0 %v51
    %77 = vmatprep.subr.mxu0 0.0
    %78 = vmatpush1.msra.mxu0 %v52
    %79 = vmatprep.subr.mxu0 0.0
    %80 = vmatpush1.msra.mxu0 %v53
    %81 = vmatprep.subr.mxu0 0.0
    %82 = vmatpush1.msra.mxu0 %v54
    %83 = vmatprep.subr.mxu0 0.0
    %84 = vmatpush1.msra.mxu0 %v55
    %85 = vmatprep.subr.mxu0 0.0
    %86 = vmatpush1.msra.mxu0 %v56
    %87 = vmatprep.subr.mxu0 0.0
    %88 = vmatpush1.msra.mxu0 %v57
    %89 = vmatprep.subr.mxu0 0.0
    %90 = vmatpush1.msra.mxu0 %v58
    %91 = vmatprep.subr.mxu0 0.0
    %92 = vmatpush1.msra.mxu0 %v59
    %93 = vmatprep.subr.mxu0 0.0
    %94 = vmatpush1.msra.mxu0 %v60
    %95 = vmatprep.subr.mxu0 0.0
    %96 = vmatpush1.msra.mxu0 %v61
    %97 = vmatprep.subr.mxu0 0.0
    %98 = vmatpush1.msra.mxu0 %v62
    %99 = vmatprep.subr.mxu0 0.0
    %100 = vmatpush1.msra.mxu0 %v63
    %101 = vmatprep.subr.mxu0 0.0
    %102 = vmatpush1.msra.mxu0 %v64
    %103 = vmatprep.subr.mxu0 0.0
    %104 = vmatpush1.msra.mxu0 %v65
    %105 = vmatprep.subr.mxu0 0.0
    %106 = vmatpush1.msra.mxu0 0.0
    %107 = vmatprep.subr.mxu0 0.0
    %108 = vmatpush1.msra.mxu0 0.0
    %109 = vmatprep.subr.mxu0 0.0
    %110 = vmatpush1.msra.mxu0 0.0
    %111 = vmatprep.subr.mxu0 0.0
    %112 = vmatpush1.msra.mxu0 0.0
    %113 = vmatprep.subr.mxu0 0.0
    %114 = vmatpush1.msra.mxu0 0.0
    %115 = vmatprep.subr.mxu0 0.0
    %116 = vmatpush1.msra.mxu0 0.0
    %117 = vmatprep.subr.mxu0 0.0
    %118 = vmatpush1.msra.mxu0 0.0
    %119 = vmatprep.subr.mxu0 0.0
    %120 = vmatpush1.msra.mxu0 0.0
    %121 = vmatprep.subr.mxu0 0.0
    %122 = vmatpush1.msra.mxu0 0.0
    %123 = vmatprep.subr.mxu0 0.0
    %124 = vmatpush1.msra.mxu0 0.0
    %125 = vmatprep.subr.mxu0 0.0
    %126 = vmatpush1.msra.mxu0 0.0
    %127 = vmatprep.subr.mxu0 0.0
    %128 = vmatpush1.msra.mxu0 0.0
    %129 = vmatprep.subr.mxu0 0.0
    %130 = vmatpush1.msra.mxu0 0.0
    %131 = vmatprep.subr.mxu0 0.0
    %132 = vmatpush1.msra.mxu0 0.0
    %133 = vmatprep.subr.mxu0 0.0
    %134 = vmatpush1.msra.mxu0 0.0
    %135 = vmatprep.subr.mxu0 0.0
    %136 = vmatpush1.msra.mxu0 0.0
    %137 = vmatprep.mubr.f32.mxu0 0.0
    %138 = vmatmul.mubr.f32.gmra.mrb[0].mxu0 %v49
    %v139 = vpop.f32.mrb[0].mxu0
    %v140 = vadd.f32 %v71, %v139
    %v141 = vpop.f32.mrb[0].mxu0
    %142 = vdwg.mxu0
    %v143 = vmax.f32 %v140, 0.0
    %v144 = vld [vmem:[#allocation5] sm:$0xff]
    %v145 = vld [vmem:[#allocation5 + $0x8] sm:$0xff]
    %v146 = vld [vmem:[#allocation5 + $0x10] sm:$0xff]
    %v147 = vld [vmem:[#allocation5 + $0x18] sm:$0xff]
    %v148 = vld [vmem:[#allocation5 + $0x20] sm:$0xff]
    %v149 = vld [vmem:[#allocation5 + $0x28] sm:$0xff]
    %v150 = vld [vmem:[#allocation5 + $0x30] sm:$0xff]
    %v151 = vld [vmem:[#allocation5 + $0x38] sm:$0xff]
    %v152 = vld [vmem:[#allocation5 + $0x40] sm:$0xff]
    %v153 = vld [vmem:[#allocation5 + $0x48] sm:$0xff]
    %v154 = vld [vmem:[#allocation5 + $0x50] sm:$0xff]
    %v155 = vld [vmem:[#allocation5 + $0x58] sm:$0xff]
    %v156 = vld [vmem:[#allocation5 + $0x60] sm:$0xff]
    %v157 = vld [vmem:[#allocation5 + $0x68] sm:$0xff]
    %v158 = vld [vmem:[#allocation5 + $0x70] sm:$0xff]
    %v159 = vld [vmem:[#allocation5 + $0x78] sm:$0xff]
    %v160 = vld [vmem:[%s4] sm:$0x1]
    %v162 = vlaneseq
    %v163 = vshrl.u32 %v162, 7
    %v164 = vsub.s32 0, %v163
    %v165 = vrot.slane %v160, %v164
    %167 = vmatprep.subr.mxu0 0.0
    %168 = vmatpush1.msra.mxu0 %v144
    %169 = vmatprep.subr.mxu0 0.0
    %170 = vmatpush1.msra.mxu0 %v145
    %171 = vmatprep.subr.mxu0 0.0
    %172 = vmatpush1.msra.mxu0 %v146
    %173 = vmatprep.subr.mxu0 0.0
    %174 = vmatpush1.msra.mxu0 %v147
    %175 = vmatprep.subr.mxu0 0.0
    %176 = vmatpush1.msra.mxu0 %v148
    %177 = vmatprep.subr.mxu0 0.0
    %178 = vmatpush1.msra.mxu0 %v149
    %179 = vmatprep.subr.mxu0 0.0
    %180 = vmatpush1.msra.mxu0 %v150
    %181 = vmatprep.subr.mxu0 0.0
    %182 = vmatpush1.msra.mxu0 %v151
    %183 = vmatprep.subr.mxu0 0.0
    %184 = vmatpush1.msra.mxu0 %v152
    %185 = vmatprep.subr.mxu0 0.0
    %186 = vmatpush1.msra.mxu0 %v153
    %187 = vmatprep.subr.mxu0 0.0
    %188 = vmatpush1.msra.mxu0 %v154
    %189 = vmatprep.subr.mxu0 0.0
    %190 = vmatpush1.msra.mxu0 %v155
    %191 = vmatprep.subr.mxu0 0.0
    %192 = vmatpush1.msra.mxu0 %v156
    %193 = vmatprep.subr.mxu0 0.0
    %194 = vmatpush1.msra.mxu0 %v157
    %195 = vmatprep.subr.mxu0 0.0
    %196 = vmatpush1.msra.mxu0 %v158
    %197 = vmatprep.subr.mxu0 0.0
    %198 = vmatpush1.msra.mxu0 %v159
    %199 = vmatprep.subr.mxu0 0.0
    %200 = vmatpush1.msra.mxu0 0.0
    %201 = vmatprep.subr.mxu0 0.0
    %202 = vmatpush1.msra.mxu0 0.0
    %203 = vmatprep.subr.mxu0 0.0
    %204 = vmatpush1.msra.mxu0 0.0
    %205 = vmatprep.subr.mxu0 0.0
    %206 = vmatpush1.msra.mxu0 0.0
    %207 = vmatprep.subr.mxu0 0.0
    %208 = vmatpush1.msra.mxu0 0.0
    %209 = vmatprep.subr.mxu0 0.0
    %210 = vmatpush1.msra.mxu0 0.0
    %211 = vmatprep.subr.mxu0 0.0
    %212 = vmatpush1.msra.mxu0 0.0
    %213 = vmatprep.subr.mxu0 0.0
    %214 = vmatpush1.msra.mxu0 0.0
    %215 = vmatprep.subr.mxu0 0.0
    %216 = vmatpush1.msra.mxu0 0.0
    %217 = vmatprep.subr.mxu0 0.0
    %218 = vmatpush1.msra.mxu0 0.0
    %219 = vmatprep.subr.mxu0 0.0
    %220 = vmatpush1.msra.mxu0 0.0
    %221 = vmatprep.subr.mxu0 0.0
    %222 = vmatpush1.msra.mxu0 0.0
    %223 = vmatprep.subr.mxu0 0.0
    %224 = vmatpush1.msra.mxu0 0.0
    %225 = vmatprep.subr.mxu0 0.0
    %226 = vmatpush1.msra.mxu0 0.0
    %227 = vmatprep.subr.mxu0 0.0
    %228 = vmatpush1.msra.mxu0 0.0
    %229 = vmatprep.subr.mxu0 0.0
    %230 = vmatpush1.msra.mxu0 0.0
    %231 = vmatprep.mubr.f32.mxu0 0.0
    %232 = vmatmul.mubr.f32.gmra.mrb[0].mxu0 %v143
    %v233 = vpop.f32.mrb[0].mxu0
    %v234 = vadd.f32 %v165, %v233
    %v235 = vpop.f32.mrb[0].mxu0
    %236 = vdwg.mxu0
    %237 = vst [vmem:[#allocation7] sm:$0xff] %v234
    // Predicated region
    $region30: #{feedforward_packed.1} parent=1 // pred_check
      _
    $region31: #{feedforward_packed.1} parent=1 // pred_check_branch
      %239 = sbr.rel (0) target = $region33
    $region32: #{feedforward_packed.1} parent=1 // pred_region
      %s241 = ssub.s32 128, 128
      %242 = vsyncadd [#allocation4], %s241
      %s244 = sshll.u32 [#allocation7], 4
      %s245 = int_to_ptr.vmem [resolvable:$true] %s244
      %247 = dma.vmem_to_hbm [thread:$0]  %s245, 128, %s5, [#allocation4]
    $region33: #{feedforward_packed.1} parent=1 // pred_fallthru
      _
    // Predicated region
    $region34: #{feedforward_packed.1} parent=1 // pred_check
      _
    $region35: #{feedforward_packed.1} parent=1 // pred_check_branch
      %249 = sbr.rel (0) target = $region37
    $region36: #{feedforward_packed.1} parent=1 // pred_region
      %250 = dma.done [#allocation4], 128
    $region37: #{feedforward_packed.1} parent=1 // pred_fallthru
      _
    %251 = vsyncpa [#allocation3], 1
    %252 = vsyncpa [#allocation6], 1
    %253 = vsyncpa [#allocation4], 1

</llo_original>
